<compile_context>
chip_gen: v7x
topology: tpu7x:2x2x1
jax: 0.10.0
libtpu: 0.0.40
codegen_flags: <defaults>
</compile_context>

<pallas_src>
import numpy as np

import jax
import jax.numpy as jnp
from jax.experimental import pallas as pl
from jax.experimental.pallas import tpu as pltpu


# ----------------------------- Pallas kernel -------------------------------

def _upsample_bilinear_kernel(x_ref, ryt_ref, rxt_ref, o_ref):
    # x_ref  : (1, C, H, W)   one image, NCHW
    # ryt_ref: (H, 2H)        Ry^T  (row-interpolation matrix, transposed)
    # rxt_ref: (W, 2W)        Rx^T  (col-interpolation matrix, transposed)
    # o_ref  : (1, C, 2H, 2W) upsampled image, NCHW
    C, H, W = x_ref.shape[1], x_ref.shape[2], x_ref.shape[3]
    H2 = ryt_ref.shape[1]
    W2 = rxt_ref.shape[1]

    x = x_ref[0].astype(jnp.float32)                       # (C, H, W)

    # contract along W on the MXU: (C*H, W) @ (W, 2W) -> (C*H, 2W)
    a = jnp.dot(x.reshape(C * H, W), rxt_ref[...],
                preferred_element_type=jnp.float32)
    a = a.reshape(C, H, W2)
    a = jnp.swapaxes(a, 1, 2)                              # (C, 2W, H)

    # contract along H on the MXU: (C*2W, H) @ (H, 2H) -> (C*2W, 2H)
    b = jnp.dot(a.reshape(C * W2, H), ryt_ref[...],
                preferred_element_type=jnp.float32)
    b = b.reshape(C, W2, H2)

    # back to (C, 2H, 2W), single store of the whole block
    o_ref[0] = jnp.swapaxes(b, 1, 2).astype(o_ref.dtype)


# --------------------------- interpolation matrix ---------------------------

def _bilinear_matrix(s_in, s_out):
    """1-D interpolation matrix R (s_out, s_in) matching PyTorch
    F.interpolate(mode='bilinear', align_corners=False)."""
    scale = s_in / s_out
    R = np.zeros((s_out, s_in), dtype=np.float64)
    for j in range(s_out):
        src = (j + 0.5) * scale - 0.5
        src = max(src, 0.0)                                # PyTorch clamps at 0
        i0 = min(int(np.floor(src)), s_in - 1)
        i1 = min(i0 + 1, s_in - 1)
        l1 = src - i0
        R[j, i0] += 1.0 - l1
        R[j, i1] += l1
    return R.astype(np.float32)


# ------------------------------ JAX wrapper ---------------------------------

def upsample_bilinear_x2(x_nchw):
    """Forward pass of Upsample: bilinear, scale_factor=2, align_corners=False.
    Input / output are NCHW (PyTorch layout)."""
    # TODO(synk): only the scale_factor=2 bilinear path of F.interpolate is
    # implemented (that is all the reference module uses).
    N, C, H, W = x_nchw.shape
    H2, W2 = 2 * H, 2 * W

    # compile-time constant interpolation matrices (transposed for RHS use)
    ryt = jnp.asarray(_bilinear_matrix(H, H2).T)           # (H, 2H)
    rxt = jnp.asarray(_bilinear_matrix(W, W2).T)           # (W, 2W)

    return pl.pallas_call(
        _upsample_bilinear_kernel,
        out_shape=jax.ShapeDtypeStruct((N, C, H2, W2), x_nchw.dtype),
        grid_spec=pltpu.PrefetchScalarGridSpec(
            num_scalar_prefetch=0,
            grid=(N,),
            in_specs=[
                pl.BlockSpec((1, C, H, W), lambda n: (n, 0, 0, 0)),
                pl.BlockSpec((H, H2), lambda n: (0, 0)),
                pl.BlockSpec((W, W2), lambda n: (0, 0)),
            ],
            out_specs=pl.BlockSpec((1, C, H2, W2), lambda n: (n, 0, 0, 0)),
        ),
        compiler_params=pltpu.CompilerParams(
            dimension_semantics=("parallel",)),
    )(x_nchw, ryt, rxt)


# ------------------------------- reference ----------------------------------

def upsample_bilinear_x2_ref(x):
    """Pure-JAX gather/lerp reference replicating PyTorch bilinear
    (align_corners=False) upsampling by 2x."""
    N, C, H, W = x.shape

    def src_idx(s_in, s_out):
        j = jnp.arange(s_out, dtype=jnp.float32)
        src = jnp.maximum((j + 0.5) * (s_in / s_out) - 0.5, 0.0)
        i0 = jnp.clip(jnp.floor(src), 0, s_in - 1).astype(jnp.int32)
        i1 = jnp.minimum(i0 + 1, s_in - 1)
        l1 = src - i0.astype(jnp.float32)
        return i0, i1, l1

    hi0, hi1, hl = src_idx(H, 2 * H)
    wi0, wi1, wl = src_idx(W, 2 * W)

    top = x[:, :, hi0, :]
    bot = x[:, :, hi1, :]
    rows = top * (1.0 - hl)[None, None, :, None] + bot * hl[None, None, :, None]

    left = rows[:, :, :, wi0]
    right = rows[:, :, :, wi1]
    return left * (1.0 - wl)[None, None, None, :] + right * wl[None, None, None, :]


# --------------------------------- main --------------------------------------

if __name__ == "__main__":
    N, C, H, W = 2, 4, 16, 16
    key = jax.random.PRNGKey(0)
    x = jax.random.normal(key, (N, C, H, W), dtype=jnp.float32)

    out = upsample_bilinear_x2(x)
    out = jax.block_until_ready(out)

    ref = upsample_bilinear_x2_ref(x)
    assert out.shape == ref.shape == (N, C, 2 * H, 2 * W), (out.shape, ref.shape)
    assert jnp.allclose(out, ref, atol=1e-5, rtol=1e-5), float(jnp.max(jnp.abs(out - ref)))

    print("KERNEL_OK")
</pallas_src>

<mosaic_0001>
module attributes {stable_mosaic.version = 11 : i64} {
  func.func @_upsample_bilinear_kernel(%arg0: i32, %arg1: memref<1x4x16x16xf32, #tpu.memory_space<vmem>>, %arg2: memref<16x32xf32, #tpu.memory_space<vmem>>, %arg3: memref<16x32xf32, #tpu.memory_space<vmem>>, %arg4: memref<1x4x32x32xf32, #tpu.memory_space<vmem>>) attributes {dimension_semantics = [#tpu.dimension_semantics<parallel>], iteration_bounds = array<i64: 2>, scalar_prefetch = 0 : i64, scratch_operands = 0 : i64, tpu.core_type = #tpu.core_type<tc>, window_params = [{transform_indices = @transform_0, window_bounds = array<i64: 1, 4, 16, 16>}, {pipeline_mode = #tpu.pipeline_mode<synchronous>, transform_indices = @transform_1, window_bounds = array<i64: 16, 32>}, {pipeline_mode = #tpu.pipeline_mode<synchronous>, transform_indices = @transform_2, window_bounds = array<i64: 16, 32>}, {transform_indices = @transform_3, window_bounds = array<i64: 1, 4, 32, 32>}]} {
    %c0 = arith.constant 0 : index
    %c0_0 = arith.constant 0 : index
    %c0_1 = arith.constant 0 : index
    %c0_2 = arith.constant 0 : index
    %0 = vector.load %arg1[%c0, %c0_0, %c0_1, %c0_2] : memref<1x4x16x16xf32, #tpu.memory_space<vmem>>, vector<1x4x16x16xf32>
    %1 = vector.shape_cast %0 : vector<1x4x16x16xf32> to vector<4x16x16xf32>
    %2 = vector.shape_cast %1 : vector<4x16x16xf32> to vector<64x16xf32>
    %c0_3 = arith.constant 0 : index
    %c0_4 = arith.constant 0 : index
    %3 = vector.load %arg3[%c0_3, %c0_4] : memref<16x32xf32, #tpu.memory_space<vmem>>, vector<16x32xf32>
    %cst = arith.constant dense<0.000000e+00> : vector<64x32xf32>
    %4 = tpu.matmul %2, %3, %cst {dimension_numbers = #tpu.dot_dimension_numbers<[1], [0], [0], [1], [0, 0, 1, 1], [], []>} : vector<64x16xf32>, vector<16x32xf32>, vector<64x32xf32> -> vector<64x32xf32>
    %5 = vector.shape_cast %4 : vector<64x32xf32> to vector<4x16x32xf32>
    %6 = tpu.transpose %5, [0, 2, 1] : vector<4x16x32xf32> -> vector<4x32x16xf32>
    %7 = vector.shape_cast %6 : vector<4x32x16xf32> to vector<128x16xf32>
    %c0_5 = arith.constant 0 : index
    %c0_6 = arith.constant 0 : index
    %8 = vector.load %arg2[%c0_5, %c0_6] : memref<16x32xf32, #tpu.memory_space<vmem>>, vector<16x32xf32>
    %cst_7 = arith.constant dense<0.000000e+00> : vector<128x32xf32>
    %9 = tpu.matmul %7, %8, %cst_7 {dimension_numbers = #tpu.dot_dimension_numbers<[1], [0], [0], [1], [0, 0, 1, 1], [], []>} : vector<128x16xf32>, vector<16x32xf32>, vector<128x32xf32> -> vector<128x32xf32>
    %10 = vector.shape_cast %9 : vector<128x32xf32> to vector<4x32x32xf32>
    %11 = tpu.transpose %10, [0, 2, 1] : vector<4x32x32xf32> -> vector<4x32x32xf32>
    %c0_8 = arith.constant 0 : index
    %c0_9 = arith.constant 0 : index
    %c0_10 = arith.constant 0 : index
    %c0_11 = arith.constant 0 : index
    %12 = vector.load %arg4[%c0_8, %c0_9, %c0_10, %c0_11] : memref<1x4x32x32xf32, #tpu.memory_space<vmem>>, vector<1x4x32x32xf32>
    %13 = vector.shape_cast %12 : vector<1x4x32x32xf32> to vector<4x32x32xf32>
    %14 = vector.shape_cast %11 : vector<4x32x32xf32> to vector<1x4x32x32xf32>
    tpu.vector_store %arg4[%c0_8, %c0_9, %c0_10, %c0_11], %14 {strides = array<i32>} : memref<1x4x32x32xf32, #tpu.memory_space<vmem>>, vector<1x4x32x32xf32>,
    return
  }
  func.func @transform_0(%arg0: i32) -> (i32, i32, i32, i32) {
    %c0_i32 = arith.constant 0 : i32
    %c0_i32_0 = arith.constant 0 : i32
    %c0_i32_1 = arith.constant 0 : i32
    %c0_i32_2 = arith.constant 0 : i32
    return %arg0, %c0_i32, %c0_i32_0, %c0_i32_1 : i32, i32, i32, i32
  }
  func.func @transform_1(%arg0: i32) -> (i32, i32) {
    %c0_i32 = arith.constant 0 : i32
    %c0_i32_0 = arith.constant 0 : i32
    %c0_i32_1 = arith.constant 0 : i32
    return %c0_i32, %c0_i32_0 : i32, i32
  }
  func.func @transform_2(%arg0: i32) -> (i32, i32) {
    %c0_i32 = arith.constant 0 : i32
    %c0_i32_0 = arith.constant 0 : i32
    %c0_i32_1 = arith.constant 0 : i32
    return %c0_i32, %c0_i32_0 : i32, i32
  }
  func.func @transform_3(%arg0: i32) -> (i32, i32, i32, i32) {
    %c0_i32 = arith.constant 0 : i32
    %c0_i32_0 = arith.constant 0 : i32
    %c0_i32_1 = arith.constant 0 : i32
    %c0_i32_2 = arith.constant 0 : i32
    return %arg0, %c0_i32, %c0_i32_0, %c0_i32_1 : i32, i32, i32, i32
  }
}

</mosaic_0001>

<llo_original>
// kernel: tpu_custom_call.1
$region0: #{tpu_custom_call.1}
  #allocation0 [shape = 'u32[]', space=smem, size = 0x4, offset = 0x4, fixed_abs, tag = 'smem constant byte address 0x4 - core index']
  #allocation1 [shape = 'u32[144,128]{1,0:T(1,128)}', space=vmem, size = 0x12000, scoped, tag = 'internal scratch']
  %s0 = inlined_call_operand.hbm [shape: f32[2,4,16,16], index: 0, kind: input, shape index: {}]
  %s1 = inlined_call_operand.hbm [shape: f32[16,32], index: 1, kind: input, shape index: {}]
  %s2 = inlined_call_operand.hbm [shape: f32[16,32], index: 2, kind: input, shape index: {}]
  %s3 = inlined_call_operand.hbm [shape: f32[2,4,32,32], index: 3, kind: output, shape index: {}]
  %s4 = sld [smem:[#allocation0]]
  $region57: #{tpu_custom_call.1} parent=0
    _
  %s6 = ssub.s32 1, %s4
  %s7 = scalar_select 0, %s6, %s4
  $region1: #{tpu_custom_call.1} parent=0
    #allocation2 [shape = 'u8[65536]{0}', space=vmem, size = 0x10000, scoped, tag = 'input window, operand 0']
    #allocation3 [shape = 's32[2]{0}', space=sflag, size = 0x8, scoped, tag = 'scoped memory for tpu_custom_call.1']
    #allocation4 [shape = 's32[2]{0}', space=sflag, size = 0x8, scoped, tag = 'scoped memory for tpu_custom_call.1']
    #allocation5 [shape = 'u8[8192]{0}', space=vmem, size = 0x2000, scoped, tag = 'input window, operand 1, single buffered']
    #allocation6 [shape = 's32[1]{0}', space=sflag, size = 0x4, scoped, tag = 'scoped memory for tpu_custom_call.1']
    #allocation7 [shape = 'u8[8192]{0}', space=vmem, size = 0x2000, scoped, tag = 'input window, operand 2, single buffered']
    #allocation8 [shape = 'u8[131072]{0}', space=vmem, size = 0x20000, scoped, tag = 'output window, operand 0']
    %8 = vsyncpa [#allocation3], 0
    %s9 = scalar_lea.sflag [#allocation3], 1
    %10 = vsyncpa %s9, 0
    %11 = vsyncpa [#allocation6], 0
    %12 = vsyncpa [#allocation4], 0
    %s13 = scalar_lea.sflag [#allocation4], 1
    %14 = vsyncpa %s13, 0
    loop: start=0, step=1, limit=4
    $region2: #{tpu_custom_call.1} parent=1 // loop_pre_header
      _
    $region3: #{tpu_custom_call.1} parent=1 // loop_header
      %s16 = sphi 0, %s20
      %p17 = scmp.ge.s32.totalorder %s16, 4
      %s26 = sphi 0, %s28
      %s29 = sphi 0, %s26
      %s30 = sphi 0, %s29
      %s46 = sphi 0, %s30
      %s50 = sphi 0, %s50
      %s52 = sphi 0, %s50
      %s53 = sphi 0, %s52
      %s67 = sphi 0, %s53
      %s71 = sphi 0, %s71
      %s73 = sphi 0, %s71
      %s74 = sphi 0, %s73
      %s88 = sphi 0, %s74
      %s94 = sphi 0, %s96
      %s97 = sphi 0, %s94
      %s98 = sphi 0, %s97
      %s114 = sphi 0, %s98
    $region4: #{tpu_custom_call.1} parent=1 // loop_header_branch
      %19 = sbr.rel (%p17) target = $region8
    $region5: #{tpu_custom_call.1} parent=1 // loop_body
      %s21 = ssub.s32 %s16, 1
      %s22 = ssub.s32 %s16, 2
      %s23 = sadd.s32 %s16, 1
      %s24 = ssub.s32 %s16, %s23
      %p25 = scmp.eq.s32.totalorder %s24, 0
      %s27 = sadd.s32 %s26, 1
      %s28 = scalar_select %p25, %s26, %s27
      %p31 = pneg %p25
      %p32 = scmp.eq.s32.totalorder %s16, 1
      %p33 = por %p31, %p32
      %p34 = scmp.ne.s32.totalorder %s26, %s29
      %p35 = scmp.eq.s32.totalorder %s16, 0
      %p36 = por %p34, %p35
      %p37 = scmp.ne.s32.totalorder %s26, %s29
      %p38 = scmp.eq.s32.totalorder %s21, 1
      %p39 = por %p37, %p38
      %p40 = scmp.ne.s32.totalorder %s29, %s30
      %p41 = scmp.eq.s32.totalorder %s21, 0
      %p42 = por %p40, %p41
      %p43 = scmp.ne.s32.totalorder %s29, %s30
      %p44 = scmp.eq.s32.totalorder %s22, 1
      %p45 = por %p43, %p44
      %p47 = scmp.ne.s32.totalorder %s30, %s46
      %p48 = scmp.eq.s32.totalorder %s22, 0
      %p49 = por %p47, %p48
      %s51 = sadd.s32 %s50, 1
      %p54 = scmp.eq.s32.totalorder %s16, 1
      %p55 = scmp.ne.s32.totalorder %s50, %s52
      %p56 = scmp.eq.s32.totalorder %s16, 0
      %p57 = por %p55, %p56
      %p58 = scmp.ne.s32.totalorder %s50, %s52
      %p59 = scmp.eq.s32.totalorder %s21, 1
      %p60 = por %p58, %p59
      %p61 = scmp.ne.s32.totalorder %s52, %s53
      %p62 = scmp.eq.s32.totalorder %s21, 0
      %p63 = por %p61, %p62
      %p64 = scmp.ne.s32.totalorder %s52, %s53
      %p65 = scmp.eq.s32.totalorder %s22, 1
      %p66 = por %p64, %p65
      %p68 = scmp.ne.s32.totalorder %s53, %s67
      %p69 = scmp.eq.s32.totalorder %s22, 0
      %p70 = por %p68, %p69
      %s72 = sadd.s32 %s71, 1
      %p75 = scmp.eq.s32.totalorder %s16, 1
      %p76 = scmp.ne.s32.totalorder %s71, %s73
      %p77 = scmp.eq.s32.totalorder %s16, 0
      %p78 = por %p76, %p77
      %p79 = scmp.ne.s32.totalorder %s71, %s73
      %p80 = scmp.eq.s32.totalorder %s21, 1
      %p81 = por %p79, %p80
      %p82 = scmp.ne.s32.totalorder %s73, %s74
      %p83 = scmp.eq.s32.totalorder %s21, 0
      %p84 = por %p82, %p83
      %p85 = scmp.ne.s32.totalorder %s73, %s74
      %p86 = scmp.eq.s32.totalorder %s22, 1
      %p87 = por %p85, %p86
      %p89 = scmp.ne.s32.totalorder %s74, %s88
      %p90 = scmp.eq.s32.totalorder %s22, 0
      %p91 = por %p89, %p90
      %s92 = ssub.s32 %s16, %s23
      %p93 = scmp.eq.s32.totalorder %s92, 0
      %s95 = sadd.s32 %s94, 1
      %s96 = scalar_select %p93, %s94, %s95
      %p99 = pneg %p93
      %p100 = scmp.eq.s32.totalorder %s16, 1
      %p101 = por %p99, %p100
      %p102 = scmp.ne.s32.totalorder %s94, %s97
      %p103 = scmp.eq.s32.totalorder %s16, 0
      %p104 = por %p102, %p103
      %p105 = scmp.ne.s32.totalorder %s94, %s97
      %p106 = scmp.eq.s32.totalorder %s21, 1
      %p107 = por %p105, %p106
      %p108 = scmp.ne.s32.totalorder %s97, %s98
      %p109 = scmp.eq.s32.totalorder %s21, 0
      %p110 = por %p108, %p109
      %p111 = scmp.ne.s32.totalorder %s97, %s98
      %p112 = scmp.eq.s32.totalorder %s22, 1
      %p113 = por %p111, %p112
      %p115 = scmp.ne.s32.totalorder %s98, %s114
      %p116 = scmp.eq.s32.totalorder %s22, 0
      %p117 = por %p115, %p116
      %p118 = scmp.le.s32.totalorder 1, %s16
      %p119 = scmp.lt.s32.totalorder %s16, 3
      %p120 = pnand %p118, %p119
      %p121 = pneg %p120
      // Predicated region
      $region9: #{tpu_custom_call.1} parent=5 // pred_check
        _
      $region10: #{tpu_custom_call.1} parent=5 // pred_check_branch
        %123 = sbr.rel (%p120) target = $region12
      $region11: #{tpu_custom_call.1} parent=5 // pred_region
        %s124 = ssub.s32 %s16, 1
        // Predicated region
        $region13: #{tpu_custom_call.1} parent=11 // pred_check
          %p125 = pneg %p63
        $region14: #{tpu_custom_call.1} parent=11 // pred_check_branch
          %127 = sbr.rel (%p125) target = $region16
        $region15: #{tpu_custom_call.1} parent=11 // pred_region
          %s129 = ssub.s32 256, 256
          %130 = vsyncadd [#allocation6], %s129
          %s131 = sshll.u32 [#allocation5], 4
          %s132 = int_to_ptr.vmem [resolvable:$true] %s131
          %137 = dma.hbm_to_vmem [thread:$0]  %s1, 256, %s132, [#allocation6], 128, 128, 8
        $region16: #{tpu_custom_call.1} parent=11 // pred_fallthru
          _
        // Predicated region
        $region17: #{tpu_custom_call.1} parent=11 // pred_check
          %p138 = pneg %p84
        $region18: #{tpu_custom_call.1} parent=11 // pred_check_branch
          %140 = sbr.rel (%p138) target = $region20
        $region19: #{tpu_custom_call.1} parent=11 // pred_region
          %s142 = ssub.s32 256, 256
          %143 = vsyncadd [#allocation6], %s142
          %s144 = sshll.u32 [#allocation7], 4
          %s145 = int_to_ptr.vmem [resolvable:$true] %s144
          %150 = dma.hbm_to_vmem [thread:$0]  %s2, 256, %s145, [#allocation6], 128, 128, 8
        $region20: #{tpu_custom_call.1} parent=11 // pred_fallthru
          _
      $region12: #{tpu_custom_call.1} parent=5 // pred_fallthru
        _
      %p151 = scmp.lt.s32.totalorder %s16, 2
      // Predicated region
      $region21: #{tpu_custom_call.1} parent=5 // pred_check
        %p152 = pneg %p151
      $region22: #{tpu_custom_call.1} parent=5 // pred_check_branch
        %154 = sbr.rel (%p152) target = $region24
      $region23: #{tpu_custom_call.1} parent=5 // pred_region
        // Predicated region
        $region25: #{tpu_custom_call.1} parent=23 // pred_check
          %p155 = pneg %p36
        $region26: #{tpu_custom_call.1} parent=23 // pred_check_branch
          %157 = sbr.rel (%p155) target = $region28
        $region27: #{tpu_custom_call.1} parent=23 // pred_region
          %s158 = sand.u32 %s26, 1
          %s159 = scalar_lea.sflag [#allocation3], %s158
          %s160 = sand.u32 %s26, 1
          %s161 = smul.addr %s160, 64
          %s162 = scalar_lea.vmem [#allocation2], %s161
          %s164 = ssub.s32 1024, 1024
          %165 = vsyncadd %s159, %s164
          %s166 = smul.addr %s16, 8
          %s167 = smul.addr %s166, 128
          %s168 = scalar_lea.hbm %s0, %s167
          %s169 = sshll.u32 %s162, 4
          %s170 = int_to_ptr.vmem [resolvable:$true] %s169
          %175 = dma.hbm_to_vmem [thread:$0]  %s168, 1024, %s170, %s159, 128, 128, 8
        $region28: #{tpu_custom_call.1} parent=23 // pred_fallthru
          _
      $region24: #{tpu_custom_call.1} parent=5 // pred_fallthru
        _
      %p176 = scmp.le.s32.totalorder 1, %s16
      %p177 = scmp.lt.s32.totalorder %s16, 3
      %p178 = pnand %p176, %p177
      %p179 = pneg %p178
      // Predicated region
      $region29: #{tpu_custom_call.1} parent=5 // pred_check
        _
      $region30: #{tpu_custom_call.1} parent=5 // pred_check_branch
        %181 = sbr.rel (%p178) target = $region32
      $region31: #{tpu_custom_call.1} parent=5 // pred_region
        %s182 = ssub.s32 %s16, 1
        %s183 = sand.u32 %s29, 1
        %s184 = scalar_lea.sflag [#allocation3], %s183
        %s185 = sand.u32 %s29, 1
        %s186 = smul.addr %s185, 64
        %s187 = scalar_lea.vmem [#allocation2], %s186
        // Predicated region
        $region33: #{tpu_custom_call.1} parent=31 // pred_check
          %p188 = pneg %p42
        $region34: #{tpu_custom_call.1} parent=31 // pred_check_branch
          %190 = sbr.rel (%p188) target = $region36
        $region35: #{tpu_custom_call.1} parent=31 // pred_region
          %191 = dma.done %s184, 1024
        $region36: #{tpu_custom_call.1} parent=31 // pred_fallthru
          _
        // Predicated region
        $region37: #{tpu_custom_call.1} parent=31 // pred_check
          %p192 = pneg %p63
        $region38: #{tpu_custom_call.1} parent=31 // pred_check_branch
          %194 = sbr.rel (%p192) target = $region40
        $region39: #{tpu_custom_call.1} parent=31 // pred_region
          %195 = dma.done [#allocation6], 256
        $region40: #{tpu_custom_call.1} parent=31 // pred_fallthru
          _
        // Predicated region
        $region41: #{tpu_custom_call.1} parent=31 // pred_check
          %p196 = pneg %p84
        $region42: #{tpu_custom_call.1} parent=31 // pred_check_branch
          %198 = sbr.rel (%p196) target = $region44
        $region43: #{tpu_custom_call.1} parent=31 // pred_region
          %199 = dma.done [#allocation6], 256
        $region44: #{tpu_custom_call.1} parent=31 // pred_fallthru
          _
        %s200 = sand.u32 %s29, 1
        %s201 = scalar_lea.sflag [#allocation3], %s200
        %s202 = sand.u32 %s29, 1
        %s203 = smul.addr %s202, 64
        %s204 = scalar_lea.vmem [#allocation2], %s203
        %p205 = pneg %p42
        %p206 = pneg %p39
        %p207 = pneg %p63
        %p208 = pneg %p60
        %p209 = pneg %p84
        %p210 = pneg %p81
        %p211 = pneg %p110
        %p212 = pneg %p107
        %s213 = sand.u32 %s97, 1
        %s214 = scalar_lea.sflag [#allocation4], %s213
        %s215 = sand.u32 %s97, 1
        %s216 = smul.addr %s215, 128
        %s217 = scalar_lea.vmem [#allocation8], %s216
        %v218 = vld [vmem:[%s187] sm:$0xff]
        %v219 = vld [vmem:[%s187 + $0x8] sm:$0xff]
        %v220 = vld [vmem:[%s187 + $0x10] sm:$0xff]
        %v221 = vld [vmem:[%s187 + $0x18] sm:$0xff]
        %v222 = vld [vmem:[%s187 + $0x20] sm:$0xff]
        %v223 = vld [vmem:[%s187 + $0x28] sm:$0xff]
        %v224 = vld [vmem:[%s187 + $0x30] sm:$0xff]
        %v225 = vld [vmem:[%s187 + $0x38] sm:$0xff]
        %v226 = vld [vmem:[#allocation7] sm:$0xff]
        %v227 = vld [vmem:[#allocation7 + $0x8] sm:$0xff]
        %vm228 = vcmask 130048
        %v230 = vsel %vm228, %v218, 0
        %v233 = vsel %vm228, %v219, 0
        %v236 = vsel %vm228, %v220, 0
        %v239 = vsel %vm228, %v221, 0
        %v242 = vsel %vm228, %v222, 0
        %v245 = vsel %vm228, %v223, 0
        %v248 = vsel %vm228, %v224, 0
        %v251 = vsel %vm228, %v225, 0
        %253 = vmatprep.subr.mxu0 0.0
        %254 = vmatpush1.msra.mxu0 %v226
        %255 = vmatprep.subr.mxu0 0.0
        %256 = vmatpush1.msra.mxu0 %v227
        %257 = vmatprep.subr.mxu0 0.0
        %258 = vmatpush1.msra.mxu0 0.0
        %259 = vmatprep.subr.mxu0 0.0
        %260 = vmatpush1.msra.mxu0 0.0
        %261 = vmatprep.subr.mxu0 0.0
        %262 = vmatpush1.msra.mxu0 0.0
        %263 = vmatprep.subr.mxu0 0.0
        %264 = vmatpush1.msra.mxu0 0.0
        %265 = vmatprep.subr.mxu0 0.0
        %266 = vmatpush1.msra.mxu0 0.0
        %267 = vmatprep.subr.mxu0 0.0
        %268 = vmatpush1.msra.mxu0 0.0
        %269 = vmatprep.subr.mxu0 0.0
        %270 = vmatpush1.msra.mxu0 0.0
        %271 = vmatprep.subr.mxu0 0.0
        %272 = vmatpush1.msra.mxu0 0.0
        %273 = vmatprep.subr.mxu0 0.0
        %274 = vmatpush1.msra.mxu0 0.0
        %275 = vmatprep.subr.mxu0 0.0
        %276 = vmatpush1.msra.mxu0 0.0
        %277 = vmatprep.subr.mxu0 0.0
        %278 = vmatpush1.msra.mxu0 0.0
        %279 = vmatprep.subr.mxu0 0.0
        %280 = vmatpush1.msra.mxu0 0.0
        %281 = vmatprep.subr.mxu0 0.0
        %282 = vmatpush1.msra.mxu0 0.0
        %283 = vmatprep.subr.mxu0 0.0
        %284 = vmatpush1.msra.mxu0 0.0
        %285 = vmatprep.subr.mxu0 0.0
        %286 = vmatpush1.msra.mxu0 0.0
        %287 = vmatprep.subr.mxu0 0.0
        %288 = vmatpush1.msra.mxu0 0.0
        %289 = vmatprep.subr.mxu0 0.0
        %290 = vmatpush1.msra.mxu0 0.0
        %291 = vmatprep.subr.mxu0 0.0
        %292 = vmatpush1.msra.mxu0 0.0
        %293 = vmatprep.subr.mxu0 0.0
        %294 = vmatpush1.msra.mxu0 0.0
        %295 = vmatprep.subr.mxu0 0.0
        %296 = vmatpush1.msra.mxu0 0.0
        %297 = vmatprep.subr.mxu0 0.0
        %298 = vmatpush1.msra.mxu0 0.0
        %299 = vmatprep.subr.mxu0 0.0
        %300 = vmatpush1.msra.mxu0 0.0
        %301 = vmatprep.subr.mxu0 0.0
        %302 = vmatpush1.msra.mxu0 0.0
        %303 = vmatprep.subr.mxu0 0.0
        %304 = vmatpush1.msra.mxu0 0.0
        %305 = vmatprep.subr.mxu0 0.0
        %306 = vmatpush1.msra.mxu0 0.0
        %307 = vmatprep.subr.mxu0 0.0
        %308 = vmatpush1.msra.mxu0 0.0
        %309 = vmatprep.subr.mxu0 0.0
        %310 = vmatpush1.msra.mxu0 0.0
        %311 = vmatprep.subr.mxu0 0.0
        %312 = vmatpush1.msra.mxu0 0.0
        %313 = vmatprep.subr.mxu0 0.0
        %314 = vmatpush1.msra.mxu0 0.0
        %315 = vmatprep.subr.mxu0 0.0
        %316 = vmatpush1.msra.mxu0 0.0
        %317 = vmatprep.mubr.f32.mxu0 0.0
        %318 = vmatmul.mubr.f32.gmra.mrb[0].mxu0 %v230
        %v319 = vpop.f32.mrb[0].mxu0
        %v320 = vadd.f32 0.0, %v319
        %v321 = vpop.f32.mrb[0].mxu0
        %322 = vmatprep.mubr.f32.mxu0 0.0
        %323 = vmatmul.mubr.f32.gmra.mrb[0].mxu0 %v233
        %v324 = vpop.f32.mrb[0].mxu0
        %v325 = vadd.f32 0.0, %v324
        %v326 = vpop.f32.mrb[0].mxu0
        %327 = vmatprep.mubr.f32.mxu0 0.0
        %328 = vmatmul.mubr.f32.gmra.mrb[0].mxu0 %v236
        %v329 = vpop.f32.mrb[0].mxu0
        %v330 = vadd.f32 0.0, %v329
        %v331 = vpop.f32.mrb[0].mxu0
        %332 = vmatprep.mubr.f32.mxu0 0.0
        %333 = vmatmul.mubr.f32.gmra.mrb[0].mxu0 %v239
        %v334 = vpop.f32.mrb[0].mxu0
        %v335 = vadd.f32 0.0, %v334
        %v336 = vpop.f32.mrb[0].mxu0
        %337 = vmatprep.mubr.f32.mxu0 0.0
        %338 = vmatmul.mubr.f32.gmra.mrb[0].mxu0 %v242
        %v339 = vpop.f32.mrb[0].mxu0
        %v340 = vadd.f32 0.0, %v339
        %v341 = vpop.f32.mrb[0].mxu0
        %342 = vmatprep.mubr.f32.mxu0 0.0
        %343 = vmatmul.mubr.f32.gmra.mrb[0].mxu0 %v245
        %v344 = vpop.f32.mrb[0].mxu0
        %v345 = vadd.f32 0.0, %v344
        %v346 = vpop.f32.mrb[0].mxu0
        %347 = vmatprep.mubr.f32.mxu0 0.0
        %348 = vmatmul.mubr.f32.gmra.mrb[0].mxu0 %v248
        %v349 = vpop.f32.mrb[0].mxu0
        %v350 = vadd.f32 0.0, %v349
        %v351 = vpop.f32.mrb[0].mxu0
        %352 = vmatprep.mubr.f32.mxu0 0.0
        %353 = vmatmul.mubr.f32.gmra.mrb[0].mxu0 %v251
        %v354 = vpop.f32.mrb[0].mxu0
        %v355 = vadd.f32 0.0, %v354
        %v356 = vpop.f32.mrb[0].mxu0
        %357 = vdwg.mxu0
        %358 = vxpose.xlu0.b32.start [1/16] %v320, 128
        %359 = vxpose.xlu0.b32.cont [2/16] %v325, 128
        %360 = vxpose.xlu0.b32.cont [3/16] 0.0, 128
        %361 = vxpose.xlu0.b32.cont [4/16] 0.0, 128
        %362 = vxpose.xlu0.b32.cont [5/16] 0.0, 128
        %363 = vxpose.xlu0.b32.cont [6/16] 0.0, 128
        %364 = vxpose.xlu0.b32.cont [7/16] 0.0, 128
        %365 = vxpose.xlu0.b32.cont [8/16] 0.0, 128
        %366 = vxpose.xlu0.b32.cont [9/16] 0.0, 128
        %367 = vxpose.xlu0.b32.cont [10/16] 0.0, 128
        %368 = vxpose.xlu0.b32.cont [11/16] 0.0, 128
        %369 = vxpose.xlu0.b32.cont [12/16] 0.0, 128
        %370 = vxpose.xlu0.b32.cont [13/16] 0.0, 128
        %371 = vxpose.xlu0.b32.cont [14/16] 0.0, 128
        %372 = vxpose.xlu0.b32.cont [15/16] 0.0, 128
        %373 = vxpose.xlu0.b32.end [16/16] 0.0, 128
        %v374 = vpop.trf.xlu0
        %v375 = vpop.trf.xlu0
        %v376 = vpop.trf.xlu0
        %v377 = vpop.trf.xlu0
        %v378 = vpop.trf.xlu0
        %v379 = vpop.trf.xlu0
        %v380 = vpop.trf.xlu0
        %v381 = vpop.trf.xlu0
        %v382 = vpop.trf.xlu0
        %v383 = vpop.trf.xlu0
        %v384 = vpop.trf.xlu0
        %v385 = vpop.trf.xlu0
        %v386 = vpop.trf.xlu0
        %v387 = vpop.trf.xlu0
        %v388 = vpop.trf.xlu0
        %v389 = vpop.trf.xlu0
        %390 = vxpose.xlu0.b32.start [1/16] %v330, 128
        %391 = vxpose.xlu0.b32.cont [2/16] %v335, 128
        %392 = vxpose.xlu0.b32.cont [3/16] 0.0, 128
        %393 = vxpose.xlu0.b32.cont [4/16] 0.0, 128
        %394 = vxpose.xlu0.b32.cont [5/16] 0.0, 128
        %395 = vxpose.xlu0.b32.cont [6/16] 0.0, 128
        %396 = vxpose.xlu0.b32.cont [7/16] 0.0, 128
        %397 = vxpose.xlu0.b32.cont [8/16] 0.0, 128
        %398 = vxpose.xlu0.b32.cont [9/16] 0.0, 128
        %399 = vxpose.xlu0.b32.cont [10/16] 0.0, 128
        %400 = vxpose.xlu0.b32.cont [11/16] 0.0, 128
        %401 = vxpose.xlu0.b32.cont [12/16] 0.0, 128
        %402 = vxpose.xlu0.b32.cont [13/16] 0.0, 128
        %403 = vxpose.xlu0.b32.cont [14/16] 0.0, 128
        %404 = vxpose.xlu0.b32.cont [15/16] 0.0, 128
        %405 = vxpose.xlu0.b32.end [16/16] 0.0, 128
        %v406 = vpop.trf.xlu0
        %v407 = vpop.trf.xlu0
        %v408 = vpop.trf.xlu0
        %v409 = vpop.trf.xlu0
        %v410 = vpop.trf.xlu0
        %v411 = vpop.trf.xlu0
        %v412 = vpop.trf.xlu0
        %v413 = vpop.trf.xlu0
        %v414 = vpop.trf.xlu0
        %v415 = vpop.trf.xlu0
        %v416 = vpop.trf.xlu0
        %v417 = vpop.trf.xlu0
        %v418 = vpop.trf.xlu0
        %v419 = vpop.trf.xlu0
        %v420 = vpop.trf.xlu0
        %v421 = vpop.trf.xlu0
        %422 = vxpose.xlu0.b32.start [1/16] %v340, 128
        %423 = vxpose.xlu0.b32.cont [2/16] %v345, 128
        %424 = vxpose.xlu0.b32.cont [3/16] 0.0, 128
        %425 = vxpose.xlu0.b32.cont [4/16] 0.0, 128
        %426 = vxpose.xlu0.b32.cont [5/16] 0.0, 128
        %427 = vxpose.xlu0.b32.cont [6/16] 0.0, 128
        %428 = vxpose.xlu0.b32.cont [7/16] 0.0, 128
        %429 = vxpose.xlu0.b32.cont [8/16] 0.0, 128
        %430 = vxpose.xlu0.b32.cont [9/16] 0.0, 128
        %431 = vxpose.xlu0.b32.cont [10/16] 0.0, 128
        %432 = vxpose.xlu0.b32.cont [11/16] 0.0, 128
        %433 = vxpose.xlu0.b32.cont [12/16] 0.0, 128
        %434 = vxpose.xlu0.b32.cont [13/16] 0.0, 128
        %435 = vxpose.xlu0.b32.cont [14/16] 0.0, 128
        %436 = vxpose.xlu0.b32.cont [15/16] 0.0, 128
        %437 = vxpose.xlu0.b32.end [16/16] 0.0, 128
        %v438 = vpop.trf.xlu0
        %v439 = vpop.trf.xlu0
        %v440 = vpop.trf.xlu0
        %v441 = vpop.trf.xlu0
        %v442 = vpop.trf.xlu0
        %v443 = vpop.trf.xlu0
        %v444 = vpop.trf.xlu0
        %v445 = vpop.trf.xlu0
        %v446 = vpop.trf.xlu0
        %v447 = vpop.trf.xlu0
        %v448 = vpop.trf.xlu0
        %v449 = vpop.trf.xlu0
        %v450 = vpop.trf.xlu0
        %v451 = vpop.trf.xlu0
        %v452 = vpop.trf.xlu0
        %v453 = vpop.trf.xlu0
        %454 = vxpose.xlu0.b32.start [1/16] %v350, 128
        %455 = vxpose.xlu0.b32.cont [2/16] %v355, 128
        %456 = vxpose.xlu0.b32.cont [3/16] 0.0, 128
        %457 = vxpose.xlu0.b32.cont [4/16] 0.0, 128
        %458 = vxpose.xlu0.b32.cont [5/16] 0.0, 128
        %459 = vxpose.xlu0.b32.cont [6/16] 0.0, 128
        %460 = vxpose.xlu0.b32.cont [7/16] 0.0, 128
        %461 = vxpose.xlu0.b32.cont [8/16] 0.0, 128
        %462 = vxpose.xlu0.b32.cont [9/16] 0.0, 128
        %463 = vxpose.xlu0.b32.cont [10/16] 0.0, 128
        %464 = vxpose.xlu0.b32.cont [11/16] 0.0, 128
        %465 = vxpose.xlu0.b32.cont [12/16] 0.0, 128
        %466 = vxpose.xlu0.b32.cont [13/16] 0.0, 128
        %467 = vxpose.xlu0.b32.cont [14/16] 0.0, 128
        %468 = vxpose.xlu0.b32.cont [15/16] 0.0, 128
        %469 = vxpose.xlu0.b32.end [16/16] 0.0, 128
        %v470 = vpop.trf.xlu0
        %v471 = vpop.trf.xlu0
        %v472 = vpop.trf.xlu0
        %v473 = vpop.trf.xlu0
        %v474 = vpop.trf.xlu0
        %v475 = vpop.trf.xlu0
        %v476 = vpop.trf.xlu0
        %v477 = vpop.trf.xlu0
        %v478 = vpop.trf.xlu0
        %v479 = vpop.trf.xlu0
        %v480 = vpop.trf.xlu0
        %v481 = vpop.trf.xlu0
        %v482 = vpop.trf.xlu0
        %v483 = vpop.trf.xlu0
        %v484 = vpop.trf.xlu0
        %v485 = vpop.trf.xlu0
        %v486 = vld [vmem:[#allocation5] sm:$0xff]
        %v487 = vld [vmem:[#allocation5 + $0x8] sm:$0xff]
        %v489 = vsel %vm228, %v374, 0
        %v492 = vsel %vm228, %v375, 0
        %v495 = vsel %vm228, %v376, 0
        %v498 = vsel %vm228, %v377, 0
        %v501 = vsel %vm228, %v406, 0
        %v504 = vsel %vm228, %v407, 0
        %v507 = vsel %vm228, %v408, 0
        %v510 = vsel %vm228, %v409, 0
        %v513 = vsel %vm228, %v438, 0
        %v516 = vsel %vm228, %v439, 0
        %v519 = vsel %vm228, %v440, 0
        %v522 = vsel %vm228, %v441, 0
        %v525 = vsel %vm228, %v470, 0
        %v528 = vsel %vm228, %v471, 0
        %v531 = vsel %vm228, %v472, 0
        %v534 = vsel %vm228, %v473, 0
        %536 = vmatprep.subr.mxu0 0.0
        %537 = vmatpush1.msra.mxu0 %v486
        %538 = vmatprep.subr.mxu0 0.0
        %539 = vmatpush1.msra.mxu0 %v487
        %540 = vmatprep.subr.mxu0 0.0
        %541 = vmatpush1.msra.mxu0 0.0
        %542 = vmatprep.subr.mxu0 0.0
        %543 = vmatpush1.msra.mxu0 0.0
        %544 = vmatprep.subr.mxu0 0.0
        %545 = vmatpush1.msra.mxu0 0.0
        %546 = vmatprep.subr.mxu0 0.0
        %547 = vmatpush1.msra.mxu0 0.0
        %548 = vmatprep.subr.mxu0 0.0
        %549 = vmatpush1.msra.mxu0 0.0
        %550 = vmatprep.subr.mxu0 0.0
        %551 = vmatpush1.msra.mxu0 0.0
        %552 = vmatprep.subr.mxu0 0.0
        %553 = vmatpush1.msra.mxu0 0.0
        %554 = vmatprep.subr.mxu0 0.0
        %555 = vmatpush1.msra.mxu0 0.0
        %556 = vmatprep.subr.mxu0 0.0
        %557 = vmatpush1.msra.mxu0 0.0
        %558 = vmatprep.subr.mxu0 0.0
        %559 = vmatpush1.msra.mxu0 0.0
        %560 = vmatprep.subr.mxu0 0.0
        %561 = vmatpush1.msra.mxu0 0.0
        %562 = vmatprep.subr.mxu0 0.0
        %563 = vmatpush1.msra.mxu0 0.0
        %564 = vmatprep.subr.mxu0 0.0
        %565 = vmatpush1.msra.mxu0 0.0
        %566 = vmatprep.subr.mxu0 0.0
        %567 = vmatpush1.msra.mxu0 0.0
        %568 = vmatprep.subr.mxu0 0.0
        %569 = vmatpush1.msra.mxu0 0.0
        %570 = vmatprep.subr.mxu0 0.0
        %571 = vmatpush1.msra.mxu0 0.0
        %572 = vmatprep.subr.mxu0 0.0
        %573 = vmatpush1.msra.mxu0 0.0
        %574 = vmatprep.subr.mxu0 0.0
        %575 = vmatpush1.msra.mxu0 0.0
        %576 = vmatprep.subr.mxu0 0.0
        %577 = vmatpush1.msra.mxu0 0.0
        %578 = vmatprep.subr.mxu0 0.0
        %579 = vmatpush1.msra.mxu0 0.0
        %580 = vmatprep.subr.mxu0 0.0
        %581 = vmatpush1.msra.mxu0 0.0
        %582 = vmatprep.subr.mxu0 0.0
        %583 = vmatpush1.msra.mxu0 0.0
        %584 = vmatprep.subr.mxu0 0.0
        %585 = vmatpush1.msra.mxu0 0.0
        %586 = vmatprep.subr.mxu0 0.0
        %587 = vmatpush1.msra.mxu0 0.0
        %588 = vmatprep.subr.mxu0 0.0
        %589 = vmatpush1.msra.mxu0 0.0
        %590 = vmatprep.subr.mxu0 0.0
        %591 = vmatpush1.msra.mxu0 0.0
        %592 = vmatprep.subr.mxu0 0.0
        %593 = vmatpush1.msra.mxu0 0.0
        %594 = vmatprep.subr.mxu0 0.0
        %595 = vmatpush1.msra.mxu0 0.0
        %596 = vmatprep.subr.mxu0 0.0
        %597 = vmatpush1.msra.mxu0 0.0
        %598 = vmatprep.subr.mxu0 0.0
        %599 = vmatpush1.msra.mxu0 0.0
        %600 = vmatprep.mubr.f32.mxu0 0.0
        %601 = vmatmul.mubr.f32.gmra.mrb[0].mxu0 %v489
        %v602 = vpop.f32.mrb[0].mxu0
        %v603 = vadd.f32 0.0, %v602
        %v604 = vpop.f32.mrb[0].mxu0
        %605 = vmatprep.mubr.f32.mxu0 0.0
        %606 = vmatmul.mubr.f32.gmra.mrb[0].mxu0 %v492
        %v607 = vpop.f32.mrb[0].mxu0
        %v608 = vadd.f32 0.0, %v607
        %v609 = vpop.f32.mrb[0].mxu0
        %610 = vmatprep.mubr.f32.mxu0 0.0
        %611 = vmatmul.mubr.f32.gmra.mrb[0].mxu0 %v495
        %v612 = vpop.f32.mrb[0].mxu0
        %v613 = vadd.f32 0.0, %v612
        %v614 = vpop.f32.mrb[0].mxu0
        %615 = vmatprep.mubr.f32.mxu0 0.0
        %616 = vmatmul.mubr.f32.gmra.mrb[0].mxu0 %v498
        %v617 = vpop.f32.mrb[0].mxu0
        %v618 = vadd.f32 0.0, %v617
        %v619 = vpop.f32.mrb[0].mxu0
        %620 = vmatprep.mubr.f32.mxu0 0.0
        %621 = vmatmul.mubr.f32.gmra.mrb[0].mxu0 %v501
        %v622 = vpop.f32.mrb[0].mxu0
        %v623 = vadd.f32 0.0, %v622
        %v624 = vpop.f32.mrb[0].mxu0
        %625 = vmatprep.mubr.f32.mxu0 0.0
        %626 = vmatmul.mubr.f32.gmra.mrb[0].mxu0 %v504
        %v627 = vpop.f32.mrb[0].mxu0
        %v628 = vadd.f32 0.0, %v627
        %v629 = vpop.f32.mrb[0].mxu0
        %630 = vmatprep.mubr.f32.mxu0 0.0
        %631 = vmatmul.mubr.f32.gmra.mrb[0].mxu0 %v507
        %v632 = vpop.f32.mrb[0].mxu0
        %v633 = vadd.f32 0.0, %v632
        %v634 = vpop.f32.mrb[0].mxu0
        %635 = vmatprep.mubr.f32.mxu0 0.0
        %636 = vmatmul.mubr.f32.gmra.mrb[0].mxu0 %v510
        %v637 = vpop.f32.mrb[0].mxu0
        %v638 = vadd.f32 0.0, %v637
        %v639 = vpop.f32.mrb[0].mxu0
        %640 = vmatprep.mubr.f32.mxu0 0.0
        %641 = vmatmul.mubr.f32.gmra.mrb[0].mxu0 %v513
        %v642 = vpop.f32.mrb[0].mxu0
        %v643 = vadd.f32 0.0, %v642
        %v644 = vpop.f32.mrb[0].mxu0
        %645 = vmatprep.mubr.f32.mxu0 0.0
        %646 = vmatmul.mubr.f32.gmra.mrb[0].mxu0 %v516
        %v647 = vpop.f32.mrb[0].mxu0
        %v648 = vadd.f32 0.0, %v647
        %v649 = vpop.f32.mrb[0].mxu0
        %650 = vmatprep.mubr.f32.mxu0 0.0
        %651 = vmatmul.mubr.f32.gmra.mrb[0].mxu0 %v519
        %v652 = vpop.f32.mrb[0].mxu0
        %v653 = vadd.f32 0.0, %v652
        %v654 = vpop.f32.mrb[0].mxu0
        %655 = vmatprep.mubr.f32.mxu0 0.0
        %656 = vmatmul.mubr.f32.gmra.mrb[0].mxu0 %v522
        %v657 = vpop.f32.mrb[0].mxu0
        %v658 = vadd.f32 0.0, %v657
        %v659 = vpop.f32.mrb[0].mxu0
        %660 = vmatprep.mubr.f32.mxu0 0.0
        %661 = vmatmul.mubr.f32.gmra.mrb[0].mxu0 %v525
        %v662 = vpop.f32.mrb[0].mxu0
        %v663 = vadd.f32 0.0, %v662
        %v664 = vpop.f32.mrb[0].mxu0
        %665 = vmatprep.mubr.f32.mxu0 0.0
        %666 = vmatmul.mubr.f32.gmra.mrb[0].mxu0 %v528
        %v667 = vpop.f32.mrb[0].mxu0
        %v668 = vadd.f32 0.0, %v667
        %v669 = vpop.f32.mrb[0].mxu0
        %670 = vmatprep.mubr.f32.mxu0 0.0
        %671 = vmatmul.mubr.f32.gmra.mrb[0].mxu0 %v531
        %v672 = vpop.f32.mrb[0].mxu0
        %v673 = vadd.f32 0.0, %v672
        %v674 = vpop.f32.mrb[0].mxu0
        %675 = vmatprep.mubr.f32.mxu0 0.0
        %676 = vmatmul.mubr.f32.gmra.mrb[0].mxu0 %v534
        %v677 = vpop.f32.mrb[0].mxu0
        %v678 = vadd.f32 0.0, %v677
        %v679 = vpop.f32.mrb[0].mxu0
        %680 = vdwg.mxu0
        %681 = vxpose.xlu0.b32.start [1/16] %v603, 128
        %682 = vxpose.xlu0.b32.cont [2/16] %v608, 128
        %683 = vxpose.xlu0.b32.cont [3/16] %v613, 128
        %684 = vxpose.xlu0.b32.cont [4/16] %v618, 128
        %685 = vxpose.xlu0.b32.cont [5/16] 0.0, 128
        %686 = vxpose.xlu0.b32.cont [6/16] 0.0, 128
        %687 = vxpose.xlu0.b32.cont [7/16] 0.0, 128
        %688 = vxpose.xlu0.b32.cont [8/16] 0.0, 128
        %689 = vxpose.xlu0.b32.cont [9/16] 0.0, 128
        %690 = vxpose.xlu0.b32.cont [10/16] 0.0, 128
        %691 = vxpose.xlu0.b32.cont [11/16] 0.0, 128
        %692 = vxpose.xlu0.b32.cont [12/16] 0.0, 128
        %693 = vxpose.xlu0.b32.cont [13/16] 0.0, 128
        %694 = vxpose.xlu0.b32.cont [14/16] 0.0, 128
        %695 = vxpose.xlu0.b32.cont [15/16] 0.0, 128
        %696 = vxpose.xlu0.b32.end [16/16] 0.0, 128
        %v697 = vpop.trf.xlu0
        %v698 = vpop.trf.xlu0
        %v699 = vpop.trf.xlu0
        %v700 = vpop.trf.xlu0
        %v701 = vpop.trf.xlu0
        %v702 = vpop.trf.xlu0
        %v703 = vpop.trf.xlu0
        %v704 = vpop.trf.xlu0
        %v705 = vpop.trf.xlu0
        %v706 = vpop.trf.xlu0
        %v707 = vpop.trf.xlu0
        %v708 = vpop.trf.xlu0
        %v709 = vpop.trf.xlu0
        %v710 = vpop.trf.xlu0
        %v711 = vpop.trf.xlu0
        %v712 = vpop.trf.xlu0
        %713 = vxpose.xlu0.b32.start [1/16] %v623, 128
        %714 = vxpose.xlu0.b32.cont [2/16] %v628, 128
        %715 = vxpose.xlu0.b32.cont [3/16] %v633, 128
        %716 = vxpose.xlu0.b32.cont [4/16] %v638, 128
        %717 = vxpose.xlu0.b32.cont [5/16] 0.0, 128
        %718 = vxpose.xlu0.b32.cont [6/16] 0.0, 128
        %719 = vxpose.xlu0.b32.cont [7/16] 0.0, 128
        %720 = vxpose.xlu0.b32.cont [8/16] 0.0, 128
        %721 = vxpose.xlu0.b32.cont [9/16] 0.0, 128
        %722 = vxpose.xlu0.b32.cont [10/16] 0.0, 128
        %723 = vxpose.xlu0.b32.cont [11/16] 0.0, 128
        %724 = vxpose.xlu0.b32.cont [12/16] 0.0, 128
        %725 = vxpose.xlu0.b32.cont [13/16] 0.0, 128
        %726 = vxpose.xlu0.b32.cont [14/16] 0.0, 128
        %727 = vxpose.xlu0.b32.cont [15/16] 0.0, 128
        %728 = vxpose.xlu0.b32.end [16/16] 0.0, 128
        %v729 = vpop.trf.xlu0
        %v730 = vpop.trf.xlu0
        %v731 = vpop.trf.xlu0
        %v732 = vpop.trf.xlu0
        %v733 = vpop.trf.xlu0
        %v734 = vpop.trf.xlu0
        %v735 = vpop.trf.xlu0
        %v736 = vpop.trf.xlu0
        %v737 = vpop.trf.xlu0
        %v738 = vpop.trf.xlu0
        %v739 = vpop.trf.xlu0
        %v740 = vpop.trf.xlu0
        %v741 = vpop.trf.xlu0
        %v742 = vpop.trf.xlu0
        %v743 = vpop.trf.xlu0
        %v744 = vpop.trf.xlu0
        %745 = vxpose.xlu0.b32.start [1/16] %v643, 128
        %746 = vxpose.xlu0.b32.cont [2/16] %v648, 128
        %747 = vxpose.xlu0.b32.cont [3/16] %v653, 128
        %748 = vxpose.xlu0.b32.cont [4/16] %v658, 128
        %749 = vxpose.xlu0.b32.cont [5/16] 0.0, 128
        %750 = vxpose.xlu0.b32.cont [6/16] 0.0, 128
        %751 = vxpose.xlu0.b32.cont [7/16] 0.0, 128
        %752 = vxpose.xlu0.b32.cont [8/16] 0.0, 128
        %753 = vxpose.xlu0.b32.cont [9/16] 0.0, 128
        %754 = vxpose.xlu0.b32.cont [10/16] 0.0, 128
        %755 = vxpose.xlu0.b32.cont [11/16] 0.0, 128
        %756 = vxpose.xlu0.b32.cont [12/16] 0.0, 128
        %757 = vxpose.xlu0.b32.cont [13/16] 0.0, 128
        %758 = vxpose.xlu0.b32.cont [14/16] 0.0, 128
        %759 = vxpose.xlu0.b32.cont [15/16] 0.0, 128
        %760 = vxpose.xlu0.b32.end [16/16] 0.0, 128
        %v761 = vpop.trf.xlu0
        %v762 = vpop.trf.xlu0
        %v763 = vpop.trf.xlu0
        %v764 = vpop.trf.xlu0
        %v765 = vpop.trf.xlu0
        %v766 = vpop.trf.xlu0
        %v767 = vpop.trf.xlu0
        %v768 = vpop.trf.xlu0
        %v769 = vpop.trf.xlu0
        %v770 = vpop.trf.xlu0
        %v771 = vpop.trf.xlu0
        %v772 = vpop.trf.xlu0
        %v773 = vpop.trf.xlu0
        %v774 = vpop.trf.xlu0
        %v775 = vpop.trf.xlu0
        %v776 = vpop.trf.xlu0
        %777 = vxpose.xlu0.b32.start [1/16] %v663, 128
        %778 = vxpose.xlu0.b32.cont [2/16] %v668, 128
        %779 = vxpose.xlu0.b32.cont [3/16] %v673, 128
        %780 = vxpose.xlu0.b32.cont [4/16] %v678, 128
        %781 = vxpose.xlu0.b32.cont [5/16] 0.0, 128
        %782 = vxpose.xlu0.b32.cont [6/16] 0.0, 128
        %783 = vxpose.xlu0.b32.cont [7/16] 0.0, 128
        %784 = vxpose.xlu0.b32.cont [8/16] 0.0, 128
        %785 = vxpose.xlu0.b32.cont [9/16] 0.0, 128
        %786 = vxpose.xlu0.b32.cont [10/16] 0.0, 128
        %787 = vxpose.xlu0.b32.cont [11/16] 0.0, 128
        %788 = vxpose.xlu0.b32.cont [12/16] 0.0, 128
        %789 = vxpose.xlu0.b32.cont [13/16] 0.0, 128
        %790 = vxpose.xlu0.b32.cont [14/16] 0.0, 128
        %791 = vxpose.xlu0.b32.cont [15/16] 0.0, 128
        %792 = vxpose.xlu0.b32.end [16/16] 0.0, 128
        %v793 = vpop.trf.xlu0
        %v794 = vpop.trf.xlu0
        %v795 = vpop.trf.xlu0
        %v796 = vpop.trf.xlu0
        %v797 = vpop.trf.xlu0
        %v798 = vpop.trf.xlu0
        %v799 = vpop.trf.xlu0
        %v800 = vpop.trf.xlu0
        %v801 = vpop.trf.xlu0
        %v802 = vpop.trf.xlu0
        %v803 = vpop.trf.xlu0
        %v804 = vpop.trf.xlu0
        %v805 = vpop.trf.xlu0
        %v806 = vpop.trf.xlu0
        %v807 = vpop.trf.xlu0
        %v808 = vpop.trf.xlu0
        %vm809 = vcmask 261120
        %810 = vst.msk [vmem:[%s217] sm:$0xff] %vm809, %v697
        %811 = vst.msk [vmem:[%s217 + $0x8] sm:$0xff] %vm809, %v698
        %812 = vst.msk [vmem:[%s217 + $0x10] sm:$0xff] %vm809, %v699
        %813 = vst.msk [vmem:[%s217 + $0x18] sm:$0xff] %vm809, %v700
        %814 = vst.msk [vmem:[%s217 + $0x20] sm:$0xff] %vm809, %v729
        %815 = vst.msk [vmem:[%s217 + $0x28] sm:$0xff] %vm809, %v730
        %816 = vst.msk [vmem:[%s217 + $0x30] sm:$0xff] %vm809, %v731
        %817 = vst.msk [vmem:[%s217 + $0x38] sm:$0xff] %vm809, %v732
        %818 = vst.msk [vmem:[%s217 + $0x40] sm:$0xff] %vm809, %v761
        %819 = vst.msk [vmem:[%s217 + $0x48] sm:$0xff] %vm809, %v762
        %820 = vst.msk [vmem:[%s217 + $0x50] sm:$0xff] %vm809, %v763
        %821 = vst.msk [vmem:[%s217 + $0x58] sm:$0xff] %vm809, %v764
        %822 = vst.msk [vmem:[%s217 + $0x60] sm:$0xff] %vm809, %v793
        %823 = vst.msk [vmem:[%s217 + $0x68] sm:$0xff] %vm809, %v794
        %824 = vst.msk [vmem:[%s217 + $0x70] sm:$0xff] %vm809, %v795
        %825 = vst.msk [vmem:[%s217 + $0x78] sm:$0xff] %vm809, %v796
        %s826 = sand.u32 %s97, 1
        %s827 = scalar_lea.sflag [#allocation4], %s826
        %s828 = sand.u32 %s97, 1
        %s829 = smul.addr %s828, 128
        %s830 = scalar_lea.vmem [#allocation8], %s829
        // Predicated region
        $region45: #{tpu_custom_call.1} parent=31 // pred_check
          %p831 = pneg %p107
        $region46: #{tpu_custom_call.1} parent=31 // pred_check_branch
          %833 = sbr.rel (%p831) target = $region48
        $region47: #{tpu_custom_call.1} parent=31 // pred_region
          %s835 = ssub.s32 2048, 2048
          %836 = vsyncadd %s827, %s835
          %s837 = smul.addr %s21, 16
          %s838 = smul.addr %s837, 128
          %s839 = scalar_lea.hbm %s3, %s838
          %s840 = sshll.u32 %s830, 4
          %s841 = int_to_ptr.vmem [resolvable:$true] %s840
          %846 = dma.vmem_to_hbm [thread:$0]  %s841, 2048, %s839, %s827, 128, 128, 8
        $region48: #{tpu_custom_call.1} parent=31 // pred_fallthru
          _
      $region32: #{tpu_custom_call.1} parent=5 // pred_fallthru
        _
      %p847 = scmp.le.s32.totalorder 2, %s16
      // Predicated region
      $region49: #{tpu_custom_call.1} parent=5 // pred_check
        %p848 = pneg %p847
      $region50: #{tpu_custom_call.1} parent=5 // pred_check_branch
        %850 = sbr.rel (%p848) target = $region52
      $region51: #{tpu_custom_call.1} parent=5 // pred_region
        %s851 = ssub.s32 %s16, 2
        // Predicated region
        $region53: #{tpu_custom_call.1} parent=51 // pred_check
          %p852 = pneg %p113
        $region54: #{tpu_custom_call.1} parent=51 // pred_check_branch
          %854 = sbr.rel (%p852) target = $region56
        $region55: #{tpu_custom_call.1} parent=51 // pred_region
          %s855 = sand.u32 %s98, 1
          %s856 = scalar_lea.sflag [#allocation4], %s855
          %s857 = sand.u32 %s98, 1
          %s858 = smul.addr %s857, 128
          %s859 = scalar_lea.vmem [#allocation8], %s858
          %860 = dma.done %s856, 2048
        $region56: #{tpu_custom_call.1} parent=51 // pred_fallthru
          _
      $region52: #{tpu_custom_call.1} parent=5 // pred_fallthru
        _
    $region6: #{tpu_custom_call.1} parent=1 // loop_footer
      %s20 = sadd.s32 1, %s16
    $region7: #{tpu_custom_call.1} parent=1 // loop_footer_branch
      %15 = sbr.rel target = $region3
    $region8: #{tpu_custom_call.1} parent=1 // loop_exit
      _
    %861 = vsyncpa [#allocation3], 1
    %s862 = scalar_lea.sflag [#allocation3], 1
    %863 = vsyncpa %s862, 1
    %864 = vsyncpa [#allocation6], 1
    %865 = vsyncpa [#allocation4], 1
    %s866 = scalar_lea.sflag [#allocation4], 1
    %867 = vsyncpa %s866, 1

</llo_original>
